<compile_context>
chip_gen: v7x
topology: tpu7x:2x2x1
jax: 0.10.0
libtpu: 0.0.40
codegen_flags: <defaults>
</compile_context>

<pallas_src>
import jax
import jax.numpy as jnp
from jax import lax
from jax.experimental import pallas as pl
from jax.experimental.pallas import tpu as pltpu

NEGATIVE_CLASS_WEIGHT = 1.0

_TARGET_BLOCK_ELEMS = 1024 * 1024          # ~4 MiB f32 per input tile
_MAX_COLS = 4096
_VMEM_LIMIT_BYTES = 32 * 1024 * 1024       # safe on v5e/v6e/v7x


def _make_kernel(pos_w, pos_v, rows, block_rows, num_blocks, needs_mask,
                 reduce_sublanes):
    pos_w = float(pos_w)
    pos_v = float(pos_v)
    neg_w = float(NEGATIVE_CLASS_WEIGHT)
    last_block = num_blocks - 1

    def kernel(x_ref, t_ref, o_ref, acc_ref):
        c = pl.program_id(0)               # megacore ("parallel") axis
        i = pl.program_id(1)               # sequential reduction axis
        n_inner = pl.num_programs(1)

        @pl.when(i == 0)
        def _init():
            acc_ref[...] = jnp.zeros_like(acc_ref)

        x = x_ref[...].astype(jnp.float32)
        t = t_ref[...].astype(jnp.float32)
        d = x - t
        w = jnp.where(t == pos_v, jnp.float32(pos_w), jnp.float32(neg_w))
        contrib = w * d * d
        cols = contrib.shape[-1]

        def _fold(v):
            # Fold sublane groups into an (8, cols) accumulator: the reshape
            # splits the second-minor dim by the native sublane count (layout
            # preserving) and the axis-0 sum is plain vreg adds (VPU only).
            if reduce_sublanes:
                return jnp.sum(v.reshape(block_rows // 8, 8, cols), axis=0)
            return v

        if needs_mask:
            b = c * n_inner + i            # unclamped global block index

            @pl.when(b < last_block)
            def _interior():
                acc_ref[...] += _fold(contrib)

            @pl.when(b >= last_block)
            def _edge():
                # Rows past `rows` belong to the ragged tail of the last real
                # block or to a clamped duplicate block; the data read there is
                # unspecified (possibly Inf/NaN) but is discarded by the select
                # below (TPU select does not propagate / trap on the dead arm).
                row_ids = b * block_rows + lax.broadcasted_iota(
                    jnp.int32, contrib.shape, 0)
                acc_ref[...] += _fold(jnp.where(row_ids < rows, contrib, 0.0))
        else:
            acc_ref[...] += _fold(contrib)

        @pl.when(i == n_inner - 1)
        def _finalize():
            partial = jnp.sum(acc_ref[...])        # one cross-lane reduce/core
            o_ref[...] = jnp.broadcast_to(partial, o_ref.shape).astype(o_ref.dtype)

    return kernel


def _dual_tensorcore():
    """Best-effort detection of chips with 2 TensorCores per device."""
    try:
        kind = jax.devices()[0].device_kind.lower().replace(" ", "")
    except Exception:
        return False
    return ("v4" in kind) or ("v5p" in kind) or ("v7" in kind) or ("tpu7" in kind)


def _choose_cols(n):
    """Largest multiple of 128 (<= _MAX_COLS) dividing n, or None."""
    if n % 128 != 0:
        return None
    for c in range(_MAX_COLS, 127, -128):
        if n % c == 0:
            return c
    return 128


def _elementwise_loss_sum(x, t, pos_w, pos_v):
    x = x.astype(jnp.float32)
    t = t.astype(jnp.float32)
    d = x - t
    w = jnp.where(t == pos_v, jnp.float32(pos_w),
                  jnp.float32(NEGATIVE_CLASS_WEIGHT))
    return jnp.sum(w * d * d)


def weighted_mse_loss(x, target, positive_class_weight=1.0,
                      positive_class_value=1.0,
                      block_elems=_TARGET_BLOCK_ELEMS):
    assert positive_class_weight >= 0.0, "positive class weight must be >= 0"
    assert x.shape == target.shape

    n = int(x.size)
    assert n > 0

    xf = jnp.reshape(x, (-1,))
    tf = jnp.reshape(target, (-1,))

    cols = _choose_cols(n)
    if cols is not None:
        main = n
        tail_sum = jnp.float32(0.0)
    else:
        # Ragged size: kernel on the largest prefix divisible by `cols`; the
        # (< cols)-element tail is handled with plain jnp (no full pad copy).
        cols = 1024 if n >= 1024 else 128
        main = (n // cols) * cols
        tail_sum = _elementwise_loss_sum(xf[main:], tf[main:],
                                         positive_class_weight,
                                         positive_class_value)

    if main == 0:
        return tail_sum / jnp.float32(n)

    rows = main // cols
    xm = xf if main == n else xf[:main]
    tm = tf if main == n else tf[:main]
    x2 = xm.reshape(rows, cols)
    t2 = tm.reshape(rows, cols)

    # Tile rows so each block is ~block_elems elements; keep block_rows a
    # multiple of 32 (f32/bf16/8-bit sublane packing) unless the whole row
    # extent fits in one block.
    target_rows = max(32, (block_elems // cols) // 32 * 32)
    block_rows = rows if rows <= target_rows else target_rows
    num_blocks = (rows + block_rows - 1) // block_rows

    # 2-way outer split only where it actually shards across TensorCores.
    n_outer = 2 if (_dual_tensorcore() and num_blocks >= 2) else 1
    n_inner = (num_blocks + n_outer - 1) // n_outer
    needs_clamp = (n_outer * n_inner) > num_blocks
    needs_mask = (rows % block_rows != 0) or needs_clamp
    reduce_sublanes = (block_rows % 8 == 0)
    acc_rows = 8 if reduce_sublanes else block_rows

    def in_map(c, i):
        b = c * n_inner + i
        if needs_clamp:
            # Clamp fully out-of-range blocks to a valid block; their
            # contribution is zeroed by the in-kernel edge mask.
            b = jnp.minimum(b, num_blocks - 1)
        return (b, 0)

    kernel = _make_kernel(positive_class_weight, positive_class_value,
                          rows, block_rows, num_blocks, needs_mask,
                          reduce_sublanes)

    bytes_accessed = main * (x.dtype.itemsize + target.dtype.itemsize) \
        + n_outer * 8 * 128 * 4
    cost = pl.CostEstimate(flops=5 * main, transcendentals=0,
                           bytes_accessed=bytes_accessed)

    out = pl.pallas_call(
        kernel,
        out_shape=jax.ShapeDtypeStruct((n_outer * 8, 128), jnp.float32),
        grid_spec=pltpu.PrefetchScalarGridSpec(
            num_scalar_prefetch=0,
            grid=(n_outer, n_inner),
            in_specs=[
                pl.BlockSpec((block_rows, cols), in_map),
                pl.BlockSpec((block_rows, cols), in_map),
            ],
            out_specs=pl.BlockSpec((8, 128), lambda c, i: (c, 0)),
            scratch_shapes=[pltpu.VMEM((acc_rows, cols), jnp.float32)],
        ),
        compiler_params=pltpu.CompilerParams(
            dimension_semantics=("parallel", "arbitrary"),
            vmem_limit_bytes=_VMEM_LIMIT_BYTES),
        cost_estimate=cost,
    )(x2, t2)

    partials = out.reshape(n_outer, 8, 128)[:, 0, 0]
    return (jnp.sum(partials) + tail_sum) / jnp.float32(n)


def _reference(x, t, pos_w, pos_v):
    mask = (t == pos_v).astype(jnp.float32)
    w = 1.0 + (pos_w - 1.0) * mask
    sw = jnp.sqrt(w)
    return jnp.mean((x.astype(jnp.float32) * sw - t.astype(jnp.float32) * sw) ** 2)


if __name__ == "__main__":
    key = jax.random.PRNGKey(0)
    k1, k2, k3, k4, k5, k6 = jax.random.split(key, 6)

    pos_w = 3.0
    pos_v = 1.0

    # Primary check: NCHW input as in the PyTorch module.
    B, C, H, W = 2, 4, 16, 16
    x = jax.random.normal(k1, (B, C, H, W), dtype=jnp.float32)
    noise = jax.random.normal(k2, (B, C, H, W), dtype=jnp.float32)
    target = jnp.where(noise > 0.5, jnp.float32(pos_v), noise)
    loss = jax.block_until_ready(
        weighted_mse_loss(x, target, positive_class_weight=pos_w,
                          positive_class_value=pos_v))
    ref = _reference(x, target, pos_w, pos_v)
    assert jnp.allclose(loss, ref, rtol=1e-5, atol=1e-5), (loss, ref)

    # Ragged-size check (prefix kernel + jnp tail, no pad copy).
    xs = jax.random.normal(k3, (2, 3, 7, 11), dtype=jnp.float32)
    ns = jax.random.normal(k4, (2, 3, 7, 11), dtype=jnp.float32)
    ts = jnp.where(ns > 0.5, jnp.float32(pos_v), ns)
    loss2 = jax.block_until_ready(
        weighted_mse_loss(xs, ts, positive_class_weight=pos_w,
                          positive_class_value=pos_v))
    ref2 = _reference(xs, ts, pos_w, pos_v)
    assert jnp.allclose(loss2, ref2, rtol=1e-5, atol=1e-5), (loss2, ref2)

    # Multi-block check: small block_elems forces >1 grid step, a partial last
    # block (pl.when-gated edge mask) and the (8, cols) folded accumulator.
    xm_ = jax.random.normal(k5, (2, 4, 80, 256), dtype=jnp.float32)
    nm_ = jax.random.normal(k6, (2, 4, 80, 256), dtype=jnp.float32)
    tm_ = jnp.where(nm_ > 0.5, jnp.float32(pos_v), nm_)
    loss3 = jax.block_until_ready(
        weighted_mse_loss(xm_, tm_, positive_class_weight=pos_w,
                          positive_class_value=pos_v,
                          block_elems=128 * 1024))
    ref3 = _reference(xm_, tm_, pos_w, pos_v)
    assert jnp.allclose(loss3, ref3, rtol=1e-5, atol=1e-5), (loss3, ref3)

    print("KERNEL_OK")
</pallas_src>

<mosaic_0001>
module attributes {stable_mosaic.version = 11 : i64} {
  func.func @kernel(%arg0: i32, %arg1: i32, %arg2: memref<1x2048xf32, #tpu.memory_space<vmem>>, %arg3: memref<1x2048xf32, #tpu.memory_space<vmem>>, %arg4: memref<8x128xf32, #tpu.memory_space<vmem>>, %arg5: memref<1x2048xf32, #tpu.memory_space<vmem>>) attributes {dimension_semantics = [#tpu.dimension_semantics<parallel>, #tpu.dimension_semantics<arbitrary>], iteration_bounds = array<i64: 1, 1>, scalar_prefetch = 0 : i64, scratch_operands = 1 : i64, tpu.core_type = #tpu.core_type<tc>, window_params = [{transform_indices = @transform_0, window_bounds = array<i64: 1, 2048>}, {transform_indices = @transform_1, window_bounds = array<i64: 1, 2048>}, {transform_indices = @transform_2, window_bounds = array<i64: 8, 128>}]} {
    %c0_i32 = arith.constant 0 : i32
    %0 = arith.cmpi eq, %arg1, %c0_i32 : i32
    %1 = arith.extui %0 : i1 to i32
    %c0_i32_0 = arith.constant 0 : i32
    %2 = arith.cmpi ne, %1, %c0_i32_0 : i32
    scf.if %2 {
      %cst_12 = arith.constant 0.000000e+00 : f32
      %19 = vector.broadcast %cst_12 : f32 to vector<1x2048xf32>
      %c0_13 = arith.constant 0 : index
      %c0_14 = arith.constant 0 : index
      %20 = vector.load %arg5[%c0_13, %c0_14] : memref<1x2048xf32, #tpu.memory_space<vmem>>, vector<1x2048xf32>
      tpu.vector_store %arg5[%c0_13, %c0_14], %19 {strides = array<i32>} : memref<1x2048xf32, #tpu.memory_space<vmem>>, vector<1x2048xf32>,
    } else {
    }
    %c0 = arith.constant 0 : index
    %c0_1 = arith.constant 0 : index
    %3 = vector.load %arg2[%c0, %c0_1] : memref<1x2048xf32, #tpu.memory_space<vmem>>, vector<1x2048xf32>
    %c0_2 = arith.constant 0 : index
    %c0_3 = arith.constant 0 : index
    %4 = vector.load %arg3[%c0_2, %c0_3] : memref<1x2048xf32, #tpu.memory_space<vmem>>, vector<1x2048xf32>
    %5 = arith.subf %3, %4 : vector<1x2048xf32>
    %cst = arith.constant 1.000000e+00 : f32
    %6 = vector.broadcast %cst : f32 to vector<1x2048xf32>
    %7 = arith.cmpf oeq, %4, %6 : vector<1x2048xf32>
    %cst_4 = arith.constant 3.000000e+00 : f32
    %cst_5 = arith.constant 1.000000e+00 : f32
    %8 = vector.broadcast %cst_4 : f32 to vector<1x2048xf32>
    %9 = vector.broadcast %cst_5 : f32 to vector<1x2048xf32>
    %10 = arith.select %7, %8, %9 : vector<1x2048xi1>, vector<1x2048xf32>
    %11 = arith.mulf %10, %5 : vector<1x2048xf32>
    %12 = arith.mulf %11, %5 : vector<1x2048xf32>
    %c0_6 = arith.constant 0 : index
    %c0_7 = arith.constant 0 : index
    %13 = vector.load %arg5[%c0_6, %c0_7] : memref<1x2048xf32, #tpu.memory_space<vmem>>, vector<1x2048xf32>
    %14 = arith.addf %13, %12 : vector<1x2048xf32>
    %c0_8 = arith.constant 0 : index
    %c0_9 = arith.constant 0 : index
    %15 = vector.load %arg5[%c0_8, %c0_9] : memref<1x2048xf32, #tpu.memory_space<vmem>>, vector<1x2048xf32>
    tpu.vector_store %arg5[%c0_8, %c0_9], %14 {strides = array<i32>} : memref<1x2048xf32, #tpu.memory_space<vmem>>, vector<1x2048xf32>,
    %c0_i32_10 = arith.constant 0 : i32
    %16 = arith.cmpi eq, %arg1, %c0_i32_10 : i32
    %17 = arith.extui %16 : i1 to i32
    %c0_i32_11 = arith.constant 0 : i32
    %18 = arith.cmpi ne, %17, %c0_i32_11 : i32
    scf.if %18 {
      %c0_12 = arith.constant 0 : index
      %c0_13 = arith.constant 0 : index
      %19 = vector.load %arg5[%c0_12, %c0_13] : memref<1x2048xf32, #tpu.memory_space<vmem>>, vector<1x2048xf32>
      %20 = vector.shape_cast %19 : vector<1x2048xf32> to vector<1x1x2048xf32>
      %cst_14 = arith.constant dense<0.000000e+00> : vector<1xf32>
      %21 = vector.multi_reduction <add>, %20, %cst_14 [1, 2] : vector<1x1x2048xf32> to vector<1xf32>
      %22 = vector.shape_cast %21 : vector<1xf32> to vector<1x1x1xf32>
      %23 = vector.extract %22[0, 0, 0] : f32 from vector<1x1x1xf32>
      %24 = vector.broadcast %23 : f32 to vector<8x128xf32>
      %c0_15 = arith.constant 0 : index
      %c0_16 = arith.constant 0 : index
      %25 = vector.load %arg4[%c0_15, %c0_16] : memref<8x128xf32, #tpu.memory_space<vmem>>, vector<8x128xf32>
      tpu.vector_store %arg4[%c0_15, %c0_16], %24 {strides = array<i32>} : memref<8x128xf32, #tpu.memory_space<vmem>>, vector<8x128xf32>,
    } else {
    }
    return
  }
  func.func @transform_0(%arg0: i32, %arg1: i32) -> (i32, i32) {
    %c1_i32 = arith.constant 1 : i32
    %0 = arith.muli %arg0, %c1_i32 : i32
    %1 = arith.addi %0, %arg1 : i32
    %c0_i32 = arith.constant 0 : i32
    %c0_i32_0 = arith.constant 0 : i32
    return %1, %c0_i32 : i32, i32
  }
  func.func @transform_1(%arg0: i32, %arg1: i32) -> (i32, i32) {
    %c1_i32 = arith.constant 1 : i32
    %0 = arith.muli %arg0, %c1_i32 : i32
    %1 = arith.addi %0, %arg1 : i32
    %c0_i32 = arith.constant 0 : i32
    %c0_i32_0 = arith.constant 0 : i32
    return %1, %c0_i32 : i32, i32
  }
  func.func @transform_2(%arg0: i32, %arg1: i32) -> (i32, i32) {
    %c0_i32 = arith.constant 0 : i32
    %c0_i32_0 = arith.constant 0 : i32
    return %arg0, %c0_i32 : i32, i32
  }
}

</mosaic_0001>

<llo_original>
// kernel: tpu_custom_call.1
$region0: #{tpu_custom_call.1}
  #allocation0 [shape = 'u32[]', space=smem, size = 0x4, offset = 0x4, fixed_abs, tag = 'smem constant byte address 0x4 - core index']
  #allocation1 [shape = 'u32[144,128]{1,0:T(1,128)}', space=vmem, size = 0x12000, scoped, tag = 'internal scratch']
  #allocation2 [shape = 'f32[1,2048]{1,0:T(1,128)}', space=vmem, size = 0x2000, scoped, tag = 'scratch operand']
  %s0 = inlined_call_operand.hbm [shape: f32[1,2048], index: 0, kind: input, shape index: {}]
  %s1 = inlined_call_operand.hbm [shape: f32[1,2048], index: 1, kind: input, shape index: {}]
  %s2 = inlined_call_operand.hbm [shape: f32[8,128], index: 2, kind: output, shape index: {}]
  %s3 = sld [smem:[#allocation0]]
  $region34: #{tpu_custom_call.1} parent=0
    _
  %s5 = ssub.s32 1, %s3
  %s6 = scalar_select 0, %s5, %s3
  $region1: #{tpu_custom_call.1} parent=0
    #allocation3 [shape = 'u8[8192]{0}', space=vmem, size = 0x2000, scoped, tag = 'input window, operand 0, single buffered']
    #allocation4 [shape = 's32[1]{0}', space=sflag, size = 0x4, scoped, tag = 'scoped memory for tpu_custom_call.1']
    #allocation5 [shape = 's32[1]{0}', space=sflag, size = 0x4, scoped, tag = 'scoped memory for tpu_custom_call.1']
    #allocation6 [shape = 'u8[8192]{0}', space=vmem, size = 0x2000, scoped, tag = 'input window, operand 1, single buffered']
    #allocation7 [shape = 's32[1]{0}', space=sflag, size = 0x4, scoped, tag = 'scoped memory for tpu_custom_call.1']
    #allocation8 [shape = 'u8[4096]{0}', space=vmem, size = 0x1000, scoped, tag = 'output window, operand 0, single buffered']
    %7 = vsyncpa [#allocation4], 0
    %8 = vsyncpa [#allocation7], 0
    %9 = vsyncpa [#allocation5], 0
    // Predicated region
    $region2: #{tpu_custom_call.1} parent=1 // pred_check
      _
    $region3: #{tpu_custom_call.1} parent=1 // pred_check_branch
      %11 = sbr.rel (0) target = $region5
    $region4: #{tpu_custom_call.1} parent=1 // pred_region
      %s12 = sadd.s32 0, 0
      %s14 = ssub.s32 256, 256
      %15 = vsyncadd [#allocation4], %s14
      %s16 = smul.addr %s12, 16
      %s17 = smul.addr %s16, 16
      %s18 = scalar_lea.hbm %s0, %s17
      %s20 = sshll.u32 [#allocation3], 4
      %s21 = int_to_ptr.vmem [resolvable:$true] %s20
      %23 = dma.hbm_to_vmem [thread:$0]  %s18, 256, %s21, [#allocation4]
    $region5: #{tpu_custom_call.1} parent=1 // pred_fallthru
      _
    // Predicated region
    $region6: #{tpu_custom_call.1} parent=1 // pred_check
      _
    $region7: #{tpu_custom_call.1} parent=1 // pred_check_branch
      %25 = sbr.rel (0) target = $region9
    $region8: #{tpu_custom_call.1} parent=1 // pred_region
      %s26 = sadd.s32 0, 0
      %s28 = ssub.s32 256, 256
      %29 = vsyncadd [#allocation7], %s28
      %s30 = smul.addr %s26, 16
      %s31 = smul.addr %s30, 16
      %s32 = scalar_lea.hbm %s1, %s31
      %s34 = sshll.u32 [#allocation6], 4
      %s35 = int_to_ptr.vmem [resolvable:$true] %s34
      %37 = dma.hbm_to_vmem [thread:$0]  %s32, 256, %s35, [#allocation7]
    $region9: #{tpu_custom_call.1} parent=1 // pred_fallthru
      _
    // Predicated region
    $region10: #{tpu_custom_call.1} parent=1 // pred_check
      _
    $region11: #{tpu_custom_call.1} parent=1 // pred_check_branch
      %39 = sbr.rel (0) target = $region13
    $region12: #{tpu_custom_call.1} parent=1 // pred_region
      %40 = dma.done [#allocation4], 256
    $region13: #{tpu_custom_call.1} parent=1 // pred_fallthru
      _
    // Predicated region
    $region14: #{tpu_custom_call.1} parent=1 // pred_check
      _
    $region15: #{tpu_custom_call.1} parent=1 // pred_check_branch
      %42 = sbr.rel (0) target = $region17
    $region16: #{tpu_custom_call.1} parent=1 // pred_region
      %43 = dma.done [#allocation7], 256
    $region17: #{tpu_custom_call.1} parent=1 // pred_fallthru
      _
    %s44 = sadd.s32 0, 0
    %s45 = sadd.s32 0, 0
    %p46 = scmp.eq.s32.totalorder 0, 0
    // Predicated region
    $region18: #{tpu_custom_call.1} parent=1 // pred_check
      %p47 = pneg %p46
    $region19: #{tpu_custom_call.1} parent=1 // pred_check_branch
      %49 = sbr.rel (%p47) target = $region21
    $region20: #{tpu_custom_call.1} parent=1 // pred_region
      %50 = vst [vmem:[#allocation2] sm:$0xff] 0.0
      %51 = vst [vmem:[#allocation2 + $0x8] sm:$0xff] 0.0
    $region21: #{tpu_custom_call.1} parent=1 // pred_fallthru
      _
    %v52 = vld [vmem:[#allocation3] sm:$0xff]
    %v53 = vld [vmem:[#allocation3 + $0x8] sm:$0xff]
    %v54 = vld [vmem:[#allocation6] sm:$0xff]
    %v55 = vld [vmem:[#allocation6 + $0x8] sm:$0xff]
    %v56 = vsub.f32 %v52, %v54
    %v57 = vsub.f32 %v53, %v55
    %vm58 = vcmp.eq.f32.partialorder %v54, 1.0
    %vm59 = vcmp.eq.f32.partialorder %v55, 1.0
    %v60 = vsel %vm58, 3.0, 1.0
    %v61 = vsel %vm59, 3.0, 1.0
    %v62 = vmul.f32 %v60, %v56
    %v63 = vmul.f32 %v61, %v57
    %v64 = vmul.f32 %v62, %v56
    %v65 = vmul.f32 %v63, %v57
    %v66 = vld [vmem:[#allocation2] sm:$0xff]
    %v67 = vld [vmem:[#allocation2 + $0x8] sm:$0xff]
    %v68 = vadd.f32 %v66, %v64
    %v69 = vadd.f32 %v67, %v65
    %70 = vst [vmem:[#allocation2] sm:$0xff] %v68
    %71 = vst [vmem:[#allocation2 + $0x8] sm:$0xff] %v69
    // Predicated region
    $region22: #{tpu_custom_call.1} parent=1 // pred_check
      %p72 = pneg %p46
    $region23: #{tpu_custom_call.1} parent=1 // pred_check_branch
      %74 = sbr.rel (%p72) target = $region25
    $region24: #{tpu_custom_call.1} parent=1 // pred_region
      %v75 = vld [vmem:[#allocation2] sm:$0xff]
      %v76 = vld [vmem:[#allocation2 + $0x8] sm:$0xff]
      %v79 = vlaneseq
      %v80 = vshrl.u32 %v79, 7
      %v81 = vsub.s32 0, %v80
      %v82 = vrot.slane %v75, %v81
      %v83 = vlaneseq
      %v84 = vshrl.u32 %v83, 7
      %v85 = vsub.s32 1, %v84
      %v86 = vrot.slane %v75, %v85
      %v87 = vlaneseq
      %v88 = vshrl.u32 %v87, 7
      %v89 = vsub.s32 2, %v88
      %v90 = vrot.slane %v75, %v89
      %v91 = vlaneseq
      %v92 = vshrl.u32 %v91, 7
      %v93 = vsub.s32 3, %v92
      %v94 = vrot.slane %v75, %v93
      %v95 = vlaneseq
      %v96 = vshrl.u32 %v95, 7
      %v97 = vsub.s32 4, %v96
      %v98 = vrot.slane %v75, %v97
      %v99 = vlaneseq
      %v100 = vshrl.u32 %v99, 7
      %v101 = vsub.s32 5, %v100
      %v102 = vrot.slane %v75, %v101
      %v103 = vlaneseq
      %v104 = vshrl.u32 %v103, 7
      %v105 = vsub.s32 6, %v104
      %v106 = vrot.slane %v75, %v105
      %v107 = vlaneseq
      %v108 = vshrl.u32 %v107, 7
      %v109 = vsub.s32 7, %v108
      %v110 = vrot.slane %v75, %v109
      %v111 = vlaneseq
      %v112 = vshrl.u32 %v111, 7
      %v113 = vsub.s32 0, %v112
      %v114 = vrot.slane %v76, %v113
      %v115 = vlaneseq
      %v116 = vshrl.u32 %v115, 7
      %v117 = vsub.s32 1, %v116
      %v118 = vrot.slane %v76, %v117
      %v119 = vlaneseq
      %v120 = vshrl.u32 %v119, 7
      %v121 = vsub.s32 2, %v120
      %v122 = vrot.slane %v76, %v121
      %v123 = vlaneseq
      %v124 = vshrl.u32 %v123, 7
      %v125 = vsub.s32 3, %v124
      %v126 = vrot.slane %v76, %v125
      %v127 = vlaneseq
      %v128 = vshrl.u32 %v127, 7
      %v129 = vsub.s32 4, %v128
      %v130 = vrot.slane %v76, %v129
      %v131 = vlaneseq
      %v132 = vshrl.u32 %v131, 7
      %v133 = vsub.s32 5, %v132
      %v134 = vrot.slane %v76, %v133
      %v135 = vlaneseq
      %v136 = vshrl.u32 %v135, 7
      %v137 = vsub.s32 6, %v136
      %v138 = vrot.slane %v76, %v137
      %v139 = vlaneseq
      %v140 = vshrl.u32 %v139, 7
      %v141 = vsub.s32 7, %v140
      %v142 = vrot.slane %v76, %v141
      %vm159 = vcmask 1040384
      %v160 = vsel %vm159, %v82, 0.0
      %v161 = vsel %vm159, %v86, 0.0
      %v162 = vadd.f32 %v160, %v161
      %v163 = vsel %vm159, %v90, 0.0
      %v164 = vadd.f32 %v162, %v163
      %v165 = vsel %vm159, %v94, 0.0
      %v166 = vadd.f32 %v164, %v165
      %v167 = vsel %vm159, %v98, 0.0
      %v168 = vadd.f32 %v166, %v167
      %v169 = vsel %vm159, %v102, 0.0
      %v170 = vadd.f32 %v168, %v169
      %v171 = vsel %vm159, %v106, 0.0
      %v172 = vadd.f32 %v170, %v171
      %v173 = vsel %vm159, %v110, 0.0
      %v174 = vadd.f32 %v172, %v173
      %v175 = vsel %vm159, %v114, 0.0
      %v176 = vadd.f32 %v174, %v175
      %v177 = vsel %vm159, %v118, 0.0
      %v178 = vadd.f32 %v176, %v177
      %v179 = vsel %vm159, %v122, 0.0
      %v180 = vadd.f32 %v178, %v179
      %v181 = vsel %vm159, %v126, 0.0
      %v182 = vadd.f32 %v180, %v181
      %v183 = vsel %vm159, %v130, 0.0
      %v184 = vadd.f32 %v182, %v183
      %v185 = vsel %vm159, %v134, 0.0
      %v186 = vadd.f32 %v184, %v185
      %v187 = vsel %vm159, %v138, 0.0
      %v188 = vadd.f32 %v186, %v187
      %v189 = vsel %vm159, %v142, 0.0
      %v190 = vadd.f32 %v188, %v189
      %191 = vadd.xlane.f32.xlu0 %v190
      %v192 = vpop.xlane.xlu0 %191
      %v193 = vrot.slane %v192, 4
      %v194 = vadd.f32 %v192, %v193
      %v195 = vrot.slane %v194, 2
      %v196 = vadd.f32 %v194, %v195
      %v197 = vrot.slane %v196, 1
      %v198 = vadd.f32 %v196, %v197
      %s199 = vtos %v198
      %v200 = vstv %s199
      %201 = vst [vmem:[#allocation8] sm:$0xff] %v200
    $region25: #{tpu_custom_call.1} parent=1 // pred_fallthru
      _
    // Predicated region
    $region26: #{tpu_custom_call.1} parent=1 // pred_check
      _
    $region27: #{tpu_custom_call.1} parent=1 // pred_check_branch
      %203 = sbr.rel (0) target = $region29
    $region28: #{tpu_custom_call.1} parent=1 // pred_region
      %s205 = ssub.s32 128, 128
      %206 = vsyncadd [#allocation5], %s205
      %s208 = sshll.u32 [#allocation8], 4
      %s209 = int_to_ptr.vmem [resolvable:$true] %s208
      %211 = dma.vmem_to_hbm [thread:$0]  %s209, 128, %s2, [#allocation5]
    $region29: #{tpu_custom_call.1} parent=1 // pred_fallthru
      _
    // Predicated region
    $region30: #{tpu_custom_call.1} parent=1 // pred_check
      _
    $region31: #{tpu_custom_call.1} parent=1 // pred_check_branch
      %213 = sbr.rel (0) target = $region33
    $region32: #{tpu_custom_call.1} parent=1 // pred_region
      %214 = dma.done [#allocation5], 128
    $region33: #{tpu_custom_call.1} parent=1 // pred_fallthru
      _
    %215 = vsyncpa [#allocation4], 1
    %216 = vsyncpa [#allocation7], 1
    %217 = vsyncpa [#allocation5], 1

</llo_original>
